<compile_context>
chip_gen: v7x
topology: tpu7x:2x2x1
jax: 0.10.0
libtpu: 0.0.40
codegen_flags: <defaults>
</compile_context>

<pallas_src>
import functools
import math

import jax
import jax.numpy as jnp
from jax.experimental import pallas as pl
from jax.experimental.pallas import tpu as pltpu


@functools.lru_cache(maxsize=None)
def _vmem_limit():
    """Per-generation scoped-VMEM budget (~3/4 of physical, capped at 100 MiB).

    ~96 MiB on the 128 MiB v5e/v6e parts, 48 MiB on 64 MiB-per-core v7x,
    conservative 48 MiB fallback if the query is unavailable.
    """
    try:
        info = pltpu.get_tpu_info()
        cap = getattr(info, "vmem_capacity_bytes", None)
        if cap is None:
            return 48 * 1024 * 1024
        return int(min(cap * 3 // 4, 100 * 1024 * 1024))
    except Exception:  # pragma: no cover - CPU / interpret fallback
        return 48 * 1024 * 1024


def _tile(dim, target, granule):
    """Largest tile <= target that is a multiple of `granule` and divides `dim`.

    Falls back to the full dimension (always correct) when no such tile exists
    or when the dimension is already small.
    # TODO(synk): for awkward B*L factorizations at large M, pad rows to a
    # multiple of 128 in the wrapper instead of falling back to full-M blocks.
    """
    if dim <= target:
        return dim
    for t in range(target, granule - 1, -granule):
        if t % granule == 0 and dim % t == 0:
            return t
    return dim


# ----------------------------- Pallas kernels ------------------------------

def _gelu(y):
    # TODO(synk): HF BERT's default GELU is the exact erf form; the tanh
    # approximation used here differs by <1e-3 relative but keeps the
    # transcendental on the well-supported EUP tanh path.
    c = math.sqrt(2.0 / math.pi)
    return 0.5 * y * (1.0 + jnp.tanh(c * (y + 0.044715 * y * y * y)))


def _dense_kernel(x_ref, w_ref, b_ref, o_ref, *, activation):
    """Whole-K (tm, tn) tile: no scratch accumulator, fused bias/GELU epilogue."""
    x = x_ref[...]
    w = w_ref[...]
    if x.dtype != w.dtype:          # activations normally arrive in bf16 already
        x = x.astype(w.dtype)
    y = jnp.dot(x, w, preferred_element_type=jnp.float32)
    y = y + b_ref[...]
    if activation == "gelu":
        y = _gelu(y)
    o_ref[...] = y.astype(o_ref.dtype)


def _dense_kernel_splitk(x_ref, w_ref, b_ref, o_ref, acc_ref, *, activation):
    """Split-K variant (only used when K is too large to hold whole)."""
    @pl.when(pl.program_id(2) == 0)
    def _init():
        acc_ref[...] = jnp.zeros_like(acc_ref)

    x = x_ref[...]
    w = w_ref[...]
    if x.dtype != w.dtype:
        x = x.astype(w.dtype)
    acc_ref[...] += jnp.dot(x, w, preferred_element_type=jnp.float32)

    @pl.when(pl.program_id(2) == pl.num_programs(2) - 1)
    def _finalize():
        y = acc_ref[...] + b_ref[...]
        if activation == "gelu":
            y = _gelu(y)
        o_ref[...] = y.astype(o_ref.dtype)


def _ln_core(x, g, b, eps):
    mu = jnp.mean(x, axis=-1, keepdims=True)
    var = jnp.mean((x - mu) ** 2, axis=-1, keepdims=True)
    return (x - mu) * jax.lax.rsqrt(var + eps) * g + b


def _ln_kernel(x_ref, g_ref, b_ref, o_ref, *, eps):
    x = x_ref[...].astype(jnp.float32)
    o_ref[...] = _ln_core(x, g_ref[...], b_ref[...], eps).astype(o_ref.dtype)


def _add_ln_kernel(x_ref, r_ref, g_ref, b_ref, o_ref, *, eps):
    # fused residual add + layernorm (saves an HBM round-trip per layer)
    x = x_ref[...].astype(jnp.float32) + r_ref[...].astype(jnp.float32)
    o_ref[...] = _ln_core(x, g_ref[...], b_ref[...], eps).astype(o_ref.dtype)


def _attention_kernel(qkv_ref, bias_ref, o_ref, *, num_heads, scale):
    """One batch row: full lane-dense (L, 3H) block, unrolled in-kernel head loop.

    qkv_ref: (L, 3H) bf16, columns laid out [q | k | v].
    bias_ref: (1, L) f32 additive mask bias (0 for keep, -1e9 for masked).
    o_ref:   (L, H) bf16.
    """
    L, H3 = qkv_ref.shape
    H = H3 // 3
    dh = H // num_heads

    qkv = qkv_ref[...]                     # single unmasked lane-dense load
    bias = bias_ref[...]                   # (1, L) f32
    # Fold the 1/sqrt(dh) scale into q (L*H multiply, not L*L per head).
    q = qkv[:, :H] * scale                 # bf16

    # TODO(synk): for very long sequences switch to query-tiled online-softmax
    # (flash-style) instead of materializing the full (L, L) score tile.
    outs = []
    for h in range(num_heads):             # static unroll; num_heads is small
        lo, hi = h * dh, (h + 1) * dh
        kh = qkv[:, H + lo:H + hi]         # (L, dh) bf16
        vh = qkv[:, 2 * H + lo:2 * H + hi]
        # Contract the dh axis of q and k directly ('qd,kd->qk'): no transpose.
        s = jax.lax.dot_general(q[:, lo:hi], kh,
                                (((1,), (1,)), ((), ())),
                                preferred_element_type=jnp.float32)   # (L, L)
        s = s + bias                        # additive mask: one VPU add
        s = s - jnp.max(s, axis=-1, keepdims=True)
        p = jnp.exp(s)
        p = p * pl.reciprocal(jnp.sum(p, axis=-1, keepdims=True), approx=True)
        outs.append(jnp.dot(p.astype(vh.dtype), vh,
                            preferred_element_type=jnp.float32))      # (L, dh)
    # Single lane-dense full-H store.
    o_ref[...] = jnp.concatenate(outs, axis=-1).astype(o_ref.dtype)


def _pool_kernel(x_ref, m_ref, o_ref, *, mode):
    # Reproduces lightautoml Sequence{Avg,Sum,Max,Cls}Pooler semantics.
    x = x_ref[...].astype(jnp.float32)                # (tb, L, H)
    m = m_ref[...]                                    # (tb, L, 1) float mask
    if mode == "mean":
        cnt = jnp.maximum(jnp.sum(m, axis=1), 1.0)    # masked_fill(count==0, 1)
        o_ref[...] = jnp.sum(x * m, axis=1) / cnt
    elif mode == "sum":
        o_ref[...] = jnp.sum(x * m, axis=1)
    elif mode == "max":
        o_ref[...] = jnp.max(jnp.where(m > 0.5, x, -jnp.inf), axis=1)
    elif mode == "cls":
        o_ref[...] = x[:, 0, :]
    else:
        raise ValueError(mode)


# ------------------------------ wrappers ------------------------------------

def dense(x, w, b, activation=None, out_dtype=jnp.bfloat16,
          tm=512, tn=2048, tk_max=4096):
    """Tiled, pipelined matmul: y = act(x @ w + b).

    For BERT-sized K (<= tk_max) the K reduction runs in a single grid step:
    no VMEM scratch round-trip, no init/finalize branches, fewer DMAs.
    """
    M, K = x.shape
    N = w.shape[1]
    tm = _tile(M, tm, 8)
    tn = _tile(N, tn, 128)
    bias = b.reshape(1, N).astype(jnp.float32)

    if K <= tk_max:
        kern = functools.partial(_dense_kernel, activation=activation)
        return pl.pallas_call(
            kern,
            grid=(M // tm, N // tn),
            in_specs=[pl.BlockSpec((tm, K), lambda i, j: (i, 0)),
                      pl.BlockSpec((K, tn), lambda i, j: (0, j)),
                      pl.BlockSpec((1, tn), lambda i, j: (0, j))],
            out_specs=pl.BlockSpec((tm, tn), lambda i, j: (i, j)),
            out_shape=jax.ShapeDtypeStruct((M, N), out_dtype),
            compiler_params=pltpu.CompilerParams(
                dimension_semantics=("parallel", "parallel"),
                vmem_limit_bytes=_vmem_limit()),
        )(x, w, bias)

    tk = _tile(K, 512, 128)
    kern = functools.partial(_dense_kernel_splitk, activation=activation)
    return pl.pallas_call(
        kern,
        grid=(M // tm, N // tn, K // tk),
        in_specs=[pl.BlockSpec((tm, tk), lambda i, j, k: (i, k)),
                  pl.BlockSpec((tk, tn), lambda i, j, k: (k, j)),
                  pl.BlockSpec((1, tn), lambda i, j, k: (0, j))],
        out_specs=pl.BlockSpec((tm, tn), lambda i, j, k: (i, j)),
        out_shape=jax.ShapeDtypeStruct((M, N), out_dtype),
        scratch_shapes=[pltpu.VMEM((tm, tn), jnp.float32)],
        compiler_params=pltpu.CompilerParams(
            dimension_semantics=("parallel", "parallel", "arbitrary"),
            vmem_limit_bytes=_vmem_limit()),
    )(x, w, bias)


def layernorm(x, g, b, residual=None, eps=1e-12, tm=512,
              out_dtype=jnp.bfloat16):
    """Row-tiled layernorm (f32 compute, bf16 stream out);
    optionally fused with a residual add."""
    M, H = x.shape
    tm = _tile(M, tm, 8)
    row_spec = pl.BlockSpec((tm, H), lambda i: (i, 0))
    vec_spec = pl.BlockSpec((1, H), lambda i: (0, 0))
    if residual is None:
        kern = functools.partial(_ln_kernel, eps=eps)
        in_specs = [row_spec, vec_spec, vec_spec]
        args = (x, g.reshape(1, H), b.reshape(1, H))
    else:
        kern = functools.partial(_add_ln_kernel, eps=eps)
        in_specs = [row_spec, row_spec, vec_spec, vec_spec]
        args = (x, residual, g.reshape(1, H), b.reshape(1, H))
    return pl.pallas_call(
        kern,
        grid=(M // tm,),
        in_specs=in_specs,
        out_specs=row_spec,
        out_shape=jax.ShapeDtypeStruct((M, H), out_dtype),
        compiler_params=pltpu.CompilerParams(
            dimension_semantics=("parallel",),
            vmem_limit_bytes=_vmem_limit()),
    )(*args)


def attention(qkv, attention_mask, num_heads, scale):
    """Self-attention on full lane-dense (L, 3H) blocks, one grid step per batch.

    qkv: [B, L, 3H] bf16 with columns laid out [q | k | v].
    Output: [B, L, H] bf16, already in the layout the output projection needs.
    Heads are sliced inside the kernel (unrolled static loop), so every HBM
    DMA in/out is a full-width (>=128-lane-friendly, full-dim) block and the
    grid has B steps instead of B*num_heads.
    """
    B, L, H3 = qkv.shape
    H = H3 // 3
    # Additive mask bias precomputed once in the wrapper: 0 keep, -1e9 masked.
    bias = ((attention_mask.astype(jnp.float32) - 1.0) * 1e9).reshape(B, 1, L)
    kern = functools.partial(_attention_kernel, num_heads=num_heads, scale=scale)
    # TODO(synk): for B == 1 on v7x add a query-row tile grid axis so both
    # TensorCores get work (flash-style online softmax).
    return pl.pallas_call(
        kern,
        grid=(B,),
        in_specs=[pl.BlockSpec((None, L, H3), lambda b: (b, 0, 0)),
                  pl.BlockSpec((None, 1, L), lambda b: (b, 0, 0))],
        out_specs=pl.BlockSpec((None, L, H), lambda b: (b, 0, 0)),
        out_shape=jax.ShapeDtypeStruct((B, L, H), jnp.bfloat16),
        compiler_params=pltpu.CompilerParams(
            dimension_semantics=("parallel",),
            vmem_limit_bytes=_vmem_limit()),
    )(qkv, bias)


def sequence_pool(x, attention_mask, mode, tb=4):
    if mode == "none":               # SequenceIdentityPooler
        return x.astype(jnp.float32)
    B, L, H = x.shape
    tb = _tile(B, tb, 1)
    kern = functools.partial(_pool_kernel, mode=mode)
    return pl.pallas_call(
        kern,
        grid=(B // tb,),
        in_specs=[pl.BlockSpec((tb, L, H), lambda i: (i, 0, 0)),
                  pl.BlockSpec((tb, L, 1), lambda i: (i, 0, 0))],
        out_specs=pl.BlockSpec((tb, H), lambda i: (i, 0)),
        out_shape=jax.ShapeDtypeStruct((B, H), jnp.float32),
        compiler_params=pltpu.CompilerParams(
            dimension_semantics=("parallel",),
            vmem_limit_bytes=_vmem_limit()),
    )(x, attention_mask.reshape(B, L, 1).astype(jnp.float32))


# --------------------------- model assembly ---------------------------------

def init_params(key, cfg):
    # TODO(synk): pretrained HuggingFace checkpoint loading replaced by
    # deterministic synthetic weights of the same shapes (bf16 matmul weights).
    H, F = cfg["hidden"], cfg["ffn"]
    std = 0.02

    def nrm(k, shape, dtype=jnp.bfloat16):
        return (std * jax.random.normal(k, shape, dtype=jnp.float32)).astype(dtype)

    keys = jax.random.split(key, 4 + cfg["layers"])
    params = {
        "cfg": cfg,
        "word_emb": nrm(keys[0], (cfg["vocab"], H), jnp.float32),
        "pos_emb": nrm(keys[1], (cfg["max_pos"], H), jnp.float32),
        "type_emb": nrm(keys[2], (cfg["type_vocab"], H), jnp.float32),
        "emb_ln_g": jnp.ones((H,), jnp.float32),
        "emb_ln_b": jnp.zeros((H,), jnp.float32),
        "layers": [],
    }
    for li in range(cfg["layers"]):
        lk = jax.random.split(keys[4 + li], 10)
        wq, wk, wv = nrm(lk[0], (H, H)), nrm(lk[1], (H, H)), nrm(lk[2], (H, H))
        params["layers"].append({
            # fused QKV projection: one (H, 3H) matmul instead of three (H, H)
            "wqkv": jnp.concatenate([wq, wk, wv], axis=1),
            "bqkv": jnp.concatenate([nrm(lk[6], (H,), jnp.float32),
                                     nrm(lk[7], (H,), jnp.float32),
                                     nrm(lk[8], (H,), jnp.float32)]),
            "wo": nrm(lk[3], (H, H)), "bo": nrm(lk[9], (H,), jnp.float32),
            "ln1_g": jnp.ones((H,), jnp.float32), "ln1_b": jnp.zeros((H,), jnp.float32),
            "w1": nrm(lk[4], (H, F)), "b1": jnp.zeros((F,), jnp.float32),
            "w2": nrm(lk[5], (F, H)), "b2": jnp.zeros((H,), jnp.float32),
            "ln2_g": jnp.ones((H,), jnp.float32), "ln2_b": jnp.zeros((H,), jnp.float32),
        })
    return params


def bert_embedder_forward(params, input_ids, attention_mask, token_type_ids,
                          pooling="none"):
    cfg = params["cfg"]
    B, L = input_ids.shape
    H, nH = cfg["hidden"], cfg["heads"]
    dh = H // nH

    # embeddings (gather / add is plain-JAX glue; layernorm is a kernel)
    x = (jnp.take(params["word_emb"], input_ids, axis=0)
         + params["pos_emb"][:L][None, :, :]
         + jnp.take(params["type_emb"], token_type_ids, axis=0))
    # bf16 activation stream between kernels (f32 compute inside each kernel)
    xf = layernorm(x.reshape(B * L, H),
                   params["emb_ln_g"], params["emb_ln_b"])        # (B*L, H) bf16

    for lp in params["layers"]:
        # fused QKV projection (bf16 output halves HBM traffic to attention)
        qkv = dense(xf, lp["wqkv"], lp["bqkv"])                    # (B*L, 3H) bf16
        # attention loads the full (L, 3H) block per batch row -> lane-dense
        ctx = attention(qkv.reshape(B, L, 3 * H), attention_mask, nH,
                        1.0 / math.sqrt(dh))                       # (B, L, H) bf16
        attn_out = dense(ctx.reshape(B * L, H), lp["wo"], lp["bo"])
        x1 = layernorm(attn_out, lp["ln1_g"], lp["ln1_b"], residual=xf)
        # FFN: fused bias+GELU epilogue; intermediate kept in bf16
        ff = dense(x1, lp["w1"], lp["b1"], activation="gelu")
        ff = dense(ff, lp["w2"], lp["b2"])
        xf = layernorm(ff, lp["ln2_g"], lp["ln2_b"], residual=x1)

    x_out = xf.reshape(B, L, H)
    # masked pooling over the sequence dimension (SequenceAvgPooler etc.)
    return sequence_pool(x_out, attention_mask, pooling)


# ------------------------------- main ----------------------------------------

if __name__ == "__main__":
    cfg = dict(vocab=100, type_vocab=2, max_pos=16,
               hidden=32, heads=4, ffn=64, layers=2)
    B, L = 2, 8

    key = jax.random.PRNGKey(0)
    pkey, ikey = jax.random.split(key)
    params = init_params(pkey, cfg)

    input_ids = jax.random.randint(ikey, (B, L), 0, cfg["vocab"], dtype=jnp.int32)
    attention_mask = jnp.array([[1, 1, 1, 1, 1, 1, 1, 1],
                                [1, 1, 1, 1, 1, 0, 0, 0]], dtype=jnp.int32)
    token_type_ids = jnp.zeros((B, L), dtype=jnp.int32)

    # default module config is pooling='none' (identity); also exercise the
    # masked mean pooler kernel.
    out_none = bert_embedder_forward(params, input_ids, attention_mask,
                                     token_type_ids, pooling="none")
    out_mean = bert_embedder_forward(params, input_ids, attention_mask,
                                     token_type_ids, pooling="mean")
    jax.block_until_ready(out_none)   # (B, L, H)
    jax.block_until_ready(out_mean)   # (B, H)

    assert out_none.shape == (B, L, cfg["hidden"])
    assert out_mean.shape == (B, cfg["hidden"])
    assert bool(jnp.all(jnp.isfinite(out_none)))
    assert bool(jnp.all(jnp.isfinite(out_mean)))
    print("KERNEL_OK")
</pallas_src>

<mosaic_0001>
module attributes {stable_mosaic.version = 11 : i64} {
  func.func @_ln_kernel(%arg0: i32, %arg1: memref<16x32xf32, #tpu.memory_space<vmem>>, %arg2: memref<1x32xf32, #tpu.memory_space<vmem>>, %arg3: memref<1x32xf32, #tpu.memory_space<vmem>>, %arg4: memref<16x32xbf16, #tpu.memory_space<vmem>>) attributes {dimension_semantics = [#tpu.dimension_semantics<parallel>], iteration_bounds = array<i64: 1>, scalar_prefetch = 0 : i64, scratch_operands = 0 : i64, tpu.core_type = #tpu.core_type<tc>, window_params = [{transform_indices = @transform_0, window_bounds = array<i64: 16, 32>}, {pipeline_mode = #tpu.pipeline_mode<synchronous>, transform_indices = @transform_1, window_bounds = array<i64: 1, 32>}, {pipeline_mode = #tpu.pipeline_mode<synchronous>, transform_indices = @transform_2, window_bounds = array<i64: 1, 32>}, {transform_indices = @transform_3, window_bounds = array<i64: 16, 32>}]} {
    %c0 = arith.constant 0 : index
    %c0_0 = arith.constant 0 : index
    %0 = vector.load %arg1[%c0, %c0_0] : memref<16x32xf32, #tpu.memory_space<vmem>>, vector<16x32xf32>
    %c0_1 = arith.constant 0 : index
    %c0_2 = arith.constant 0 : index
    %1 = vector.load %arg2[%c0_1, %c0_2] : memref<1x32xf32, #tpu.memory_space<vmem>>, vector<1x32xf32>
    %c0_3 = arith.constant 0 : index
    %c0_4 = arith.constant 0 : index
    %2 = vector.load %arg3[%c0_3, %c0_4] : memref<1x32xf32, #tpu.memory_space<vmem>>, vector<1x32xf32>
    %cst = arith.constant dense<0.000000e+00> : vector<16xf32>
    %3 = vector.multi_reduction <add>, %0, %cst [1] : vector<16x32xf32> to vector<16xf32>
    %4 = vector.shape_cast %3 : vector<16xf32> to vector<16x1xf32>
    %cst_5 = arith.constant 3.200000e+01 : f32
    %5 = vector.broadcast %cst_5 : f32 to vector<16x1xf32>
    %6 = arith.divf %4, %5 : vector<16x1xf32>
    %7 = vector.broadcast %6 : vector<16x1xf32> to vector<16x32xf32>
    %8 = arith.subf %0, %7 : vector<16x32xf32>
    %9 = arith.mulf %8, %8 : vector<16x32xf32>
    %cst_6 = arith.constant dense<0.000000e+00> : vector<16xf32>
    %10 = vector.multi_reduction <add>, %9, %cst_6 [1] : vector<16x32xf32> to vector<16xf32>
    %11 = vector.shape_cast %10 : vector<16xf32> to vector<16x1xf32>
    %cst_7 = arith.constant 3.200000e+01 : f32
    %12 = vector.broadcast %cst_7 : f32 to vector<16x1xf32>
    %13 = arith.divf %11, %12 : vector<16x1xf32>
    %14 = vector.broadcast %6 : vector<16x1xf32> to vector<16x32xf32>
    %15 = arith.subf %0, %14 : vector<16x32xf32>
    %cst_8 = arith.constant 9.99999996E-13 : f32
    %16 = vector.broadcast %cst_8 : f32 to vector<16x1xf32>
    %17 = arith.addf %13, %16 : vector<16x1xf32>
    %18 = math.rsqrt %17 : vector<16x1xf32>
    %19 = vector.broadcast %18 : vector<16x1xf32> to vector<16x32xf32>
    %20 = arith.mulf %15, %19 : vector<16x32xf32>
    %21 = vector.broadcast %1 : vector<1x32xf32> to vector<16x32xf32>
    %22 = arith.mulf %20, %21 : vector<16x32xf32>
    %23 = vector.broadcast %2 : vector<1x32xf32> to vector<16x32xf32>
    %24 = arith.addf %22, %23 : vector<16x32xf32>
    %25 = arith.truncf %24 : vector<16x32xf32> to vector<16x32xbf16>
    %c0_9 = arith.constant 0 : index
    %c0_10 = arith.constant 0 : index
    %26 = vector.load %arg4[%c0_9, %c0_10] : memref<16x32xbf16, #tpu.memory_space<vmem>>, vector<16x32xbf16>
    tpu.vector_store %arg4[%c0_9, %c0_10], %25 {strides = array<i32>} : memref<16x32xbf16, #tpu.memory_space<vmem>>, vector<16x32xbf16>,
    return
  }
  func.func @transform_0(%arg0: i32) -> (i32, i32) {
    %c0_i32 = arith.constant 0 : i32
    %c0_i32_0 = arith.constant 0 : i32
    return %arg0, %c0_i32 : i32, i32
  }
  func.func @transform_1(%arg0: i32) -> (i32, i32) {
    %c0_i32 = arith.constant 0 : i32
    %c0_i32_0 = arith.constant 0 : i32
    %c0_i32_1 = arith.constant 0 : i32
    return %c0_i32, %c0_i32_0 : i32, i32
  }
  func.func @transform_2(%arg0: i32) -> (i32, i32) {
    %c0_i32 = arith.constant 0 : i32
    %c0_i32_0 = arith.constant 0 : i32
    %c0_i32_1 = arith.constant 0 : i32
    return %c0_i32, %c0_i32_0 : i32, i32
  }
  func.func @transform_3(%arg0: i32) -> (i32, i32) {
    %c0_i32 = arith.constant 0 : i32
    %c0_i32_0 = arith.constant 0 : i32
    return %arg0, %c0_i32 : i32, i32
  }
}

</mosaic_0001>

<llo_original>
// kernel: tpu_custom_call.1
$region0: #{tpu_custom_call.1}
  #allocation0 [shape = 'u32[]', space=smem, size = 0x4, offset = 0x4, fixed_abs, tag = 'smem constant byte address 0x4 - core index']
  #allocation1 [shape = 'u32[144,128]{1,0:T(1,128)}', space=vmem, size = 0x12000, scoped, tag = 'internal scratch']
  %s0 = inlined_call_operand.hbm [shape: f32[16,32], index: 0, kind: input, shape index: {}]
  %s1 = inlined_call_operand.vmem [shape: f32[1,32], index: 1, kind: input, shape index: {}]
  %s2 = inlined_call_operand.vmem [shape: f32[1,32], index: 2, kind: input, shape index: {}]
  %s3 = inlined_call_operand.hbm [shape: bf16[16,32], index: 3, kind: output, shape index: {}]
  %s4 = sld [smem:[#allocation0]]
  $region26: #{tpu_custom_call.1} parent=0
    _
  %s6 = ssub.s32 1, %s4
  %s7 = scalar_select 0, %s6, %s4
  $region1: #{tpu_custom_call.1} parent=0
    #allocation2 [shape = 'u8[8192]{0}', space=vmem, size = 0x2000, scoped, tag = 'input window, operand 0, single buffered']
    #allocation3 [shape = 's32[1]{0}', space=sflag, size = 0x4, scoped, tag = 'scoped memory for tpu_custom_call.1']
    #allocation4 [shape = 's32[1]{0}', space=sflag, size = 0x4, scoped, tag = 'scoped memory for tpu_custom_call.1']
    #allocation5 [shape = 'u8[4096]{0}', space=vmem, size = 0x1000, scoped, tag = 'output window, operand 0, single buffered']
    %8 = vsyncpa [#allocation3], 0
    %9 = vsyncpa [#allocation4], 0
    // Predicated region
    $region2: #{tpu_custom_call.1} parent=1 // pred_check
      _
    $region3: #{tpu_custom_call.1} parent=1 // pred_check_branch
      %11 = sbr.rel (0) target = $region5
    $region4: #{tpu_custom_call.1} parent=1 // pred_region
      %s13 = ssub.s32 256, 256
      %14 = vsyncadd [#allocation3], %s13
      %s15 = sshll.u32 [#allocation2], 4
      %s16 = int_to_ptr.vmem [resolvable:$true] %s15
      %21 = dma.hbm_to_vmem [thread:$0]  %s0, 256, %s16, [#allocation3], 128, 128, 8
    $region5: #{tpu_custom_call.1} parent=1 // pred_fallthru
      _
    // Predicated region
    $region6: #{tpu_custom_call.1} parent=1 // pred_check
      _
    $region7: #{tpu_custom_call.1} parent=1 // pred_check_branch
      %23 = sbr.rel (0) target = $region9
    $region8: #{tpu_custom_call.1} parent=1 // pred_region
      _
    $region9: #{tpu_custom_call.1} parent=1 // pred_fallthru
      _
    // Predicated region
    $region10: #{tpu_custom_call.1} parent=1 // pred_check
      _
    $region11: #{tpu_custom_call.1} parent=1 // pred_check_branch
      %25 = sbr.rel (0) target = $region13
    $region12: #{tpu_custom_call.1} parent=1 // pred_region
      _
    $region13: #{tpu_custom_call.1} parent=1 // pred_fallthru
      _
    // Predicated region
    $region14: #{tpu_custom_call.1} parent=1 // pred_check
      _
    $region15: #{tpu_custom_call.1} parent=1 // pred_check_branch
      %27 = sbr.rel (0) target = $region17
    $region16: #{tpu_custom_call.1} parent=1 // pred_region
      %28 = dma.done [#allocation3], 256
    $region17: #{tpu_custom_call.1} parent=1 // pred_fallthru
      _
    %v29 = vld [vmem:[#allocation2] sm:$0xff]
    %v30 = vld [vmem:[#allocation2 + $0x8] sm:$0xff]
    %v31 = vld [vmem:[%s1] sm:$0x1]
    %v32 = vld [vmem:[%s2] sm:$0x1]
    %vm33 = vcmask 261120
    %v34 = vsel %vm33, %v29, 0.0
    %35 = vadd.xlane.f32.xlu0 %v34
    %v36 = vpop.xlane.xlu0 %35
    %v37 = vsel %vm33, %v30, 0.0
    %38 = vadd.xlane.f32.xlu0 %v37
    %v39 = vpop.xlane.xlu0 %38
    %v40 = vrcp.pop 32.0
    %v41 = vmul.f32 %v36, %v40
    %v42 = vmul.f32 %v39, %v40
    %v43 = vsub.f32 %v29, %v41
    %v44 = vsub.f32 %v30, %v42
    %v45 = vmul.f32 %v43, %v43
    %v46 = vmul.f32 %v44, %v44
    %v47 = vsel %vm33, %v45, 0.0
    %48 = vadd.xlane.f32.xlu0 %v47
    %v49 = vpop.xlane.xlu0 %48
    %v50 = vsel %vm33, %v46, 0.0
    %51 = vadd.xlane.f32.xlu0 %v50
    %v52 = vpop.xlane.xlu0 %51
    %v53 = vmul.f32 %v49, %v40
    %v54 = vmul.f32 %v52, %v40
    %v55 = vadd.f32 %v53, 1e-12
    %v56 = vadd.f32 %v54, 1e-12
    %v57 = vrsqrt.pop %v55
    %v58 = vrsqrt.pop %v56
    %v59 = vmul.f32 %v43, %v57
    %v60 = vmul.f32 %v44, %v58
    %v62 = vlaneseq
    %v63 = vshrl.u32 %v62, 7
    %v64 = vsub.s32 0, %v63
    %v65 = vrot.slane %v31, %v64
    %v67 = vmul.f32 %v59, %v65
    %v68 = vmul.f32 %v60, %v65
    %v70 = vlaneseq
    %v71 = vshrl.u32 %v70, 7
    %v72 = vsub.s32 0, %v71
    %v73 = vrot.slane %v32, %v72
    %v75 = vadd.f32 %v67, %v73
    %v76 = vadd.f32 %v68, %v73
    %v77 = vpack.c.bf16 %v76, %v75
    %v79 = vunpack.c.l.b16 %v77
    %v80 = vunpack.c.h.b16 %v77
    %v81 = vpack.c.b16 %v79, %v79
    %v82 = vpack.c.b16 %v80, %v80
    %vm85 = vcmask 257024
    %86 = vst.msk [vmem:[#allocation5] sm:$0xf] %vm85, %v81
    %87 = vst.msk [vmem:[#allocation5 + $0x4] sm:$0xf] %vm85, %v82
    // Predicated region
    $region18: #{tpu_custom_call.1} parent=1 // pred_check
      _
    $region19: #{tpu_custom_call.1} parent=1 // pred_check_branch
      %89 = sbr.rel (0) target = $region21
    $region20: #{tpu_custom_call.1} parent=1 // pred_region
      %s91 = ssub.s32 128, 128
      %92 = vsyncadd [#allocation4], %s91
      %s93 = sshll.u32 [#allocation5], 4
      %s94 = int_to_ptr.vmem [resolvable:$true] %s93
      %99 = dma.vmem_to_hbm [thread:$0]  %s94, 128, %s3, [#allocation4], 64, 64, 4
    $region21: #{tpu_custom_call.1} parent=1 // pred_fallthru
      _
    // Predicated region
    $region22: #{tpu_custom_call.1} parent=1 // pred_check
      _
    $region23: #{tpu_custom_call.1} parent=1 // pred_check_branch
      %101 = sbr.rel (0) target = $region25
    $region24: #{tpu_custom_call.1} parent=1 // pred_region
      %102 = dma.done [#allocation4], 128
    $region25: #{tpu_custom_call.1} parent=1 // pred_fallthru
      _
    %103 = vsyncpa [#allocation3], 1
    %104 = vsyncpa [#allocation4], 1

</llo_original>
